<compile_context>
chip_gen: v7x
topology: tpu7x:2x2x1
jax: 0.10.0
libtpu: 0.0.40
codegen_flags: <defaults>
</compile_context>

<pallas_src>
import functools

import jax
import jax.numpy as jnp
from jax.experimental import pallas as pl
from jax.experimental.pallas import tpu as pltpu


# ---------------------------------------------------------------------------
# Helpers
# ---------------------------------------------------------------------------

def _round_up(x, m):
    return ((x + m - 1) // m) * m


def _vmem_budget_bytes():
    """Physical VMEM per TensorCore minus compiler headroom (generation-gated)."""
    try:
        cap = int(pltpu.get_tpu_info().vmem_capacity_bytes)
    except Exception:
        cap = 64 * 1024 * 1024  # conservative fallback (v7x-sized)
    # Leave ~15% headroom for Mosaic internal scratch / spills.
    return int(cap * 0.85)


def _row_align(itemsize):
    """Sublane packing: 8 rows for 4-byte, 16 for 2-byte, 32 for 1-byte dtypes."""
    return max(8, 32 // int(itemsize))


def _vmem_need_bytes(tm, th, in_dim, out_pad, itemsize, use_scratch):
    """Double-buffered {x, fused-weight, down-weight, out} tiles (+ fp32 acc)."""
    need = 2 * (tm * in_dim + in_dim * 2 * th + th * out_pad + tm * out_pad) * itemsize
    if use_scratch:
        need += tm * out_pad * 4
    return need


def _pick_tm(M, tm_target, row_align):
    """Token tile: big for weight reuse, but cap last-tile padding waste."""
    M_al = _round_up(M, row_align)
    if M_al <= tm_target:
        return M_al                      # single token tile, minimal padding
    tm = tm_target
    # Shrink tm while the ragged-last-tile padding exceeds ~12.5% of the work.
    while tm > 4 * row_align and (_round_up(M_al, tm) - M_al) * 8 > M_al:
        tm //= 2
    return max(row_align, tm)


# ---------------------------------------------------------------------------
# Kernels
# ---------------------------------------------------------------------------

def _swiglu_kernel_f32out(x_ref, wgu_ref, wd_ref, o_ref):
    """f32-output variant: accumulate directly into the resident output block.

    x_ref  : (tm, in_dim)      VMEM
    wgu_ref: (in_dim, 2*th)    VMEM   [gate tile | up tile]
    wd_ref : (th, out_pad)     VMEM
    o_ref  : (tm, out_pad) f32 VMEM   (resident across the hidden axis)
    """
    h = pl.program_id(1)

    @pl.when(h == 0)
    def _():
        o_ref[...] = jnp.zeros_like(o_ref)

    gu = jnp.dot(x_ref[...], wgu_ref[...], preferred_element_type=jnp.float32)
    th = gu.shape[1] // 2
    gate = gu[:, :th]
    up = gu[:, th:]
    hid = (gate * jax.nn.sigmoid(gate)) * up          # SiLU(gate) * up, fp32
    # dropout -> identity (eval mode)
    o_ref[...] += jnp.dot(hid.astype(wd_ref.dtype), wd_ref[...],
                          preferred_element_type=jnp.float32)


def _swiglu_kernel_scratch(x_ref, wgu_ref, wd_ref, o_ref, acc_ref):
    """Low-precision-output variant: fp32 scratch accumulator, cast at the end."""
    h = pl.program_id(1)

    @pl.when(h == 0)
    def _():
        acc_ref[...] = jnp.zeros_like(acc_ref)

    gu = jnp.dot(x_ref[...], wgu_ref[...], preferred_element_type=jnp.float32)
    th = gu.shape[1] // 2
    gate = gu[:, :th]
    up = gu[:, th:]
    hid = (gate * jax.nn.sigmoid(gate)) * up
    acc_ref[...] += jnp.dot(hid.astype(wd_ref.dtype), wd_ref[...],
                            preferred_element_type=jnp.float32)

    @pl.when(h == pl.num_programs(1) - 1)
    def _():
        o_ref[...] = acc_ref[...].astype(o_ref.dtype)


# ---------------------------------------------------------------------------
# One-time weight preparation (NOT on the per-call path)
# ---------------------------------------------------------------------------

def prepare_mlp_weights(w_gate, w_up, w_down, *, tm_target=512):
    """Pad + fuse the weights ONCE (at parameter-load time) and pick tiles.

    w_gate/w_up: (in_dim, hidden); w_down: (hidden, out_dim).
    Returns a dict with the fused (in_dim, n_h*2*th) [gate|up] weight, the
    padded (hid_pad, out_pad) down-proj weight, and the chosen tiling.
    """
    in_dim, hidden = w_gate.shape
    out_dim = w_down.shape[1]
    dtype = w_gate.dtype
    itemsize = jnp.dtype(dtype).itemsize
    use_scratch = dtype != jnp.float32

    out_pad = _round_up(out_dim, 128)     # lane-dense output stores
    budget = _vmem_budget_bytes()

    # Hidden-tile ladder: prefer resident weights (th = full padded hidden,
    # n_h = 1 -> weights DMA'd once for the whole call), else stream th-wide.
    full_th = _round_up(hidden, 128)
    candidates = [full_th] + [c for c in (1024, 512, 256, 128) if c < full_th]
    th = candidates[-1]
    tm_t = tm_target
    found = False
    while not found and tm_t >= 64:
        for c in candidates:
            if _vmem_need_bytes(tm_t, c, in_dim, out_pad, itemsize, use_scratch) <= budget:
                th, found = c, True
                break
        if not found:
            tm_t //= 2                    # very large in/out dims: shrink token tile
    hid_pad = _round_up(hidden, th)
    n_h = hid_pad // th

    # Zero-pad: padded hidden columns give silu(0)*0 = 0 and padded w_down
    # rows/cols are zero, so the visible output slice is exact.
    wg_p = jnp.pad(w_gate, ((0, 0), (0, hid_pad - hidden)))
    wu_p = jnp.pad(w_up, ((0, 0), (0, hid_pad - hidden)))
    wd_p = jnp.pad(w_down, ((0, hid_pad - hidden), (0, out_pad - out_dim)))

    # Fuse gate/up so hidden-tile h owns columns [h*2*th, (h+1)*2*th) = [gate_h | up_h].
    w_gu = jnp.concatenate(
        [wg_p.reshape(in_dim, n_h, 1, th), wu_p.reshape(in_dim, n_h, 1, th)],
        axis=2,
    ).reshape(in_dim, n_h * 2 * th)

    return {
        "w_gu": w_gu, "w_down": wd_p,
        "in_dim": in_dim, "hidden": hidden, "out_dim": out_dim,
        "hid_pad": hid_pad, "out_pad": out_pad,
        "th": th, "n_h": n_h, "tm_target": tm_t,
        "vmem_budget": budget, "use_scratch": use_scratch,
    }


# ---------------------------------------------------------------------------
# Forward
# ---------------------------------------------------------------------------

def swiglu_mlp(x, prep):
    """x: (M, in_dim) -> (M, out_dim) using pre-fused/padded weights in `prep`."""
    M, in_dim = x.shape
    assert in_dim == prep["in_dim"]
    dtype = x.dtype
    itemsize = jnp.dtype(dtype).itemsize
    w_itemsize = jnp.dtype(prep["w_gu"].dtype).itemsize

    th, n_h = prep["th"], prep["n_h"]
    out_pad, hid_pad, out_dim = prep["out_pad"], prep["hid_pad"], prep["out_dim"]
    use_scratch = dtype != jnp.float32

    tm = _pick_tm(M, prep["tm_target"], _row_align(itemsize))
    M_pad = _round_up(M, tm)
    x_p = jnp.pad(x, ((0, M_pad - M), (0, 0))) if M_pad != M else x
    n_tok_tiles = M_pad // tm

    # Advisory cost estimate: weights are re-streamed once per token tile when
    # the hidden axis is tiled (n_h > 1); DMA'd once when resident (n_h == 1).
    weight_streams = 1 if n_h == 1 else n_tok_tiles
    flops = 2 * M_pad * (in_dim * 2 * hid_pad + hid_pad * out_pad)
    bytes_accessed = (x_p.size * itemsize
                      + weight_streams * (prep["w_gu"].size + prep["w_down"].size) * w_itemsize
                      + M_pad * out_pad * itemsize)

    # Scoped-VMEM limit: cover double-buffered tiles (+ acc), never exceed the
    # generation's physical budget (64 MiB/TC on v7x, 128 MiB on v5e/v6e).
    need = _vmem_need_bytes(tm, th, in_dim, out_pad, itemsize, use_scratch)
    vmem_limit = int(min(prep["vmem_budget"], max(32 * 1024 * 1024, need + (8 << 20))))

    if use_scratch:
        kernel = _swiglu_kernel_scratch
        scratch_shapes = [pltpu.VMEM((tm, out_pad), jnp.float32)]
    else:
        kernel = _swiglu_kernel_f32out   # accumulate straight into o_ref (f32)
        scratch_shapes = []

    y_pad = pl.pallas_call(
        kernel,
        out_shape=jax.ShapeDtypeStruct((M_pad, out_pad), dtype),
        grid_spec=pltpu.PrefetchScalarGridSpec(
            num_scalar_prefetch=0,
            grid=(n_tok_tiles, n_h),                     # tokens (parallel), hidden (reduction)
            in_specs=[
                pl.BlockSpec((tm, in_dim), lambda i, h: (i, 0)),      # x tile
                pl.BlockSpec((in_dim, 2 * th), lambda i, h: (0, h)),  # fused [gate|up] tile
                pl.BlockSpec((th, out_pad), lambda i, h: (h, 0)),     # down-proj tile
            ],
            out_specs=pl.BlockSpec((tm, out_pad), lambda i, h: (i, 0)),
            scratch_shapes=scratch_shapes,
        ),
        compiler_params=pltpu.CompilerParams(
            dimension_semantics=("parallel", "arbitrary"),
            vmem_limit_bytes=vmem_limit,
        ),
        cost_estimate=pl.CostEstimate(
            flops=int(flops),
            transcendentals=int(M_pad * hid_pad),
            bytes_accessed=int(bytes_accessed),
        ),
    )(x_p, prep["w_gu"], prep["w_down"])

    return y_pad[:M, :out_dim]


def mlp_forward(x_bsd, prep):
    """x_bsd: (B, S, in_dim) -> (B, S, out_dim). Glue reshapes stay in JAX."""
    B, S, in_dim = x_bsd.shape
    y2d = swiglu_mlp(x_bsd.reshape(B * S, in_dim), prep)
    return y2d.reshape(B, S, prep["out_dim"])


# ---------------------------------------------------------------------------
# Init / reference
# ---------------------------------------------------------------------------

def init_params(key, in_dim, hidden_dim, out_dim, dtype=jnp.float32):
    """nn.Linear-style init U(-1/sqrt(fan_in), 1/sqrt(fan_in)); weights stored
    transposed as (in_features, out_features)."""
    kg, ku, kd = jax.random.split(key, 3)
    bg = 1.0 / (in_dim ** 0.5)
    bd = 1.0 / (hidden_dim ** 0.5)
    w_gate = jax.random.uniform(kg, (in_dim, hidden_dim), dtype, -bg, bg)
    w_up = jax.random.uniform(ku, (in_dim, hidden_dim), dtype, -bg, bg)
    w_down = jax.random.uniform(kd, (hidden_dim, out_dim), dtype, -bd, bd)
    return {"w_gate": w_gate, "w_up": w_up, "w_down": w_down}


def reference_forward(x_bsd, params):
    gate = x_bsd @ params["w_gate"]
    up = x_bsd @ params["w_up"]
    h = jax.nn.silu(gate) * up
    return h @ params["w_down"]     # dropout is identity in eval mode


# ---------------------------------------------------------------------------
# Demo / self-check
# ---------------------------------------------------------------------------

if __name__ == "__main__":
    # Small shapes consistent with the module: batch=2, seq=8, in=32, hidden=64, out=32
    B, S, IN, HID, OUT = 2, 8, 32, 64, 32

    key = jax.random.PRNGKey(0)
    kx, kp = jax.random.split(key)
    x = jax.random.normal(kx, (B, S, IN), dtype=jnp.float32)
    params = init_params(kp, IN, HID, OUT, dtype=jnp.float32)

    # One-time weight preprocessing (pad + fuse), outside the forward path.
    prep = prepare_mlp_weights(params["w_gate"], params["w_up"], params["w_down"])
    prep = {k: (jax.block_until_ready(v) if isinstance(v, jax.Array) else v)
            for k, v in prep.items()}

    fwd = jax.jit(functools.partial(mlp_forward, prep=prep))
    y = jax.block_until_ready(fwd(x))

    y_ref = reference_forward(x, params)
    assert y.shape == (B, S, OUT)
    assert jnp.allclose(y, y_ref, atol=1e-5, rtol=1e-5), "mismatch vs JAX reference"

    print("KERNEL_OK")
</pallas_src>

<mosaic_0001>
module attributes {stable_mosaic.version = 11 : i64} {
  func.func @_swiglu_kernel_f32out(%arg0: i32, %arg1: i32, %arg2: memref<16x32xf32, #tpu.memory_space<vmem>>, %arg3: memref<32x256xf32, #tpu.memory_space<vmem>>, %arg4: memref<128x128xf32, #tpu.memory_space<vmem>>, %arg5: memref<16x128xf32, #tpu.memory_space<vmem>>) attributes {dimension_semantics = [#tpu.dimension_semantics<parallel>, #tpu.dimension_semantics<arbitrary>], iteration_bounds = array<i64: 1, 1>, scalar_prefetch = 0 : i64, scratch_operands = 0 : i64, tpu.core_type = #tpu.core_type<tc>, window_params = [{transform_indices = @transform_0, window_bounds = array<i64: 16, 32>}, {transform_indices = @transform_1, window_bounds = array<i64: 32, 256>}, {transform_indices = @transform_2, window_bounds = array<i64: 128, 128>}, {transform_indices = @transform_3, window_bounds = array<i64: 16, 128>}]} {
    %c0_i32 = arith.constant 0 : i32
    %0 = arith.cmpi eq, %arg1, %c0_i32 : i32
    %1 = arith.extui %0 : i1 to i32
    %c0_i32_0 = arith.constant 0 : i32
    %2 = arith.cmpi ne, %1, %c0_i32_0 : i32
    scf.if %2 {
      %cst_12 = arith.constant 0.000000e+00 : f32
      %20 = vector.broadcast %cst_12 : f32 to vector<16x128xf32>
      %c0_13 = arith.constant 0 : index
      %c0_14 = arith.constant 0 : index
      %21 = vector.load %arg5[%c0_13, %c0_14] : memref<16x128xf32, #tpu.memory_space<vmem>>, vector<16x128xf32>
      tpu.vector_store %arg5[%c0_13, %c0_14], %20 {strides = array<i32>} : memref<16x128xf32, #tpu.memory_space<vmem>>, vector<16x128xf32>,
    } else {
    }
    %c0 = arith.constant 0 : index
    %c0_1 = arith.constant 0 : index
    %3 = vector.load %arg2[%c0, %c0_1] : memref<16x32xf32, #tpu.memory_space<vmem>>, vector<16x32xf32>
    %c0_2 = arith.constant 0 : index
    %c0_3 = arith.constant 0 : index
    %4 = vector.load %arg3[%c0_2, %c0_3] : memref<32x256xf32, #tpu.memory_space<vmem>>, vector<32x256xf32>
    %cst = arith.constant dense<0.000000e+00> : vector<16x256xf32>
    %5 = tpu.matmul %3, %4, %cst {dimension_numbers = #tpu.dot_dimension_numbers<[1], [0], [0], [1], [0, 0, 1, 1], [], []>} : vector<16x32xf32>, vector<32x256xf32>, vector<16x256xf32> -> vector<16x256xf32>
    %6 = vector.extract_strided_slice %5 {offsets = [0, 0], sizes = [16, 128], strides = [1, 1]} : vector<16x256xf32> to vector<16x128xf32>
    %7 = vector.extract_strided_slice %5 {offsets = [0, 128], sizes = [16, 128], strides = [1, 1]} : vector<16x256xf32> to vector<16x128xf32>
    %8 = arith.negf %6 : vector<16x128xf32>
    %9 = math.exp %8 : vector<16x128xf32>
    %cst_4 = arith.constant 1.000000e+00 : f32
    %10 = vector.broadcast %cst_4 : f32 to vector<16x128xf32>
    %11 = arith.addf %10, %9 : vector<16x128xf32>
    %12 = arith.divf %10, %11 : vector<16x128xf32>
    %13 = arith.mulf %6, %12 : vector<16x128xf32>
    %14 = arith.mulf %13, %7 : vector<16x128xf32>
    %c0_5 = arith.constant 0 : index
    %c0_6 = arith.constant 0 : index
    %15 = vector.load %arg5[%c0_5, %c0_6] : memref<16x128xf32, #tpu.memory_space<vmem>>, vector<16x128xf32>
    %c0_7 = arith.constant 0 : index
    %c0_8 = arith.constant 0 : index
    %16 = vector.load %arg4[%c0_7, %c0_8] : memref<128x128xf32, #tpu.memory_space<vmem>>, vector<128x128xf32>
    %cst_9 = arith.constant dense<0.000000e+00> : vector<16x128xf32>
    %17 = tpu.matmul %14, %16, %cst_9 {dimension_numbers = #tpu.dot_dimension_numbers<[1], [0], [0], [1], [0, 0, 1, 1], [], []>} : vector<16x128xf32>, vector<128x128xf32>, vector<16x128xf32> -> vector<16x128xf32>
    %18 = arith.addf %15, %17 : vector<16x128xf32>
    %c0_10 = arith.constant 0 : index
    %c0_11 = arith.constant 0 : index
    %19 = vector.load %arg5[%c0_10, %c0_11] : memref<16x128xf32, #tpu.memory_space<vmem>>, vector<16x128xf32>
    tpu.vector_store %arg5[%c0_10, %c0_11], %18 {strides = array<i32>} : memref<16x128xf32, #tpu.memory_space<vmem>>, vector<16x128xf32>,
    return
  }
  func.func @transform_0(%arg0: i32, %arg1: i32) -> (i32, i32) {
    %c0_i32 = arith.constant 0 : i32
    %c0_i32_0 = arith.constant 0 : i32
    return %arg0, %c0_i32 : i32, i32
  }
  func.func @transform_1(%arg0: i32, %arg1: i32) -> (i32, i32) {
    %c0_i32 = arith.constant 0 : i32
    %c0_i32_0 = arith.constant 0 : i32
    return %c0_i32, %arg1 : i32, i32
  }
  func.func @transform_2(%arg0: i32, %arg1: i32) -> (i32, i32) {
    %c0_i32 = arith.constant 0 : i32
    %c0_i32_0 = arith.constant 0 : i32
    return %arg1, %c0_i32 : i32, i32
  }
  func.func @transform_3(%arg0: i32, %arg1: i32) -> (i32, i32) {
    %c0_i32 = arith.constant 0 : i32
    %c0_i32_0 = arith.constant 0 : i32
    return %arg0, %c0_i32 : i32, i32
  }
}

</mosaic_0001>

<llo_original>
// kernel: mlp_forward.1
$region0: #{mlp_forward.1}
  #allocation0 [shape = 'u32[]', space=smem, size = 0x4, offset = 0x4, fixed_abs, tag = 'smem constant byte address 0x4 - core index']
  #allocation1 [shape = 'u32[144,128]{1,0:T(1,128)}', space=vmem, size = 0x12000, scoped, tag = 'internal scratch']
  %s0 = inlined_call_operand.hbm [shape: f32[16,32], index: 0, kind: input, shape index: {}]
  %s1 = inlined_call_operand.hbm [shape: f32[32,256], index: 1, kind: input, shape index: {}]
  %s2 = inlined_call_operand.hbm [shape: f32[128,128], index: 2, kind: input, shape index: {}]
  %s3 = inlined_call_operand.vmem [shape: f32[16,128], index: 3, kind: output, shape index: {}]
  %s4 = sld [smem:[#allocation0]]
  $region38: #{mlp_forward.1} parent=0
    _
  %s6 = ssub.s32 1, %s4
  %s7 = scalar_select 0, %s6, %s4
  $region1: #{mlp_forward.1} parent=0
    #allocation2 [shape = 'u8[8192]{0}', space=vmem, size = 0x2000, scoped, tag = 'input window, operand 0, single buffered']
    #allocation3 [shape = 's32[1]{0}', space=sflag, size = 0x4, scoped, tag = 'scoped memory for mlp_forward.1']
    #allocation4 [shape = 'u8[32768]{0}', space=vmem, size = 0x8000, scoped, tag = 'input window, operand 1, single buffered']
    #allocation5 [shape = 's32[1]{0}', space=sflag, size = 0x4, scoped, tag = 'scoped memory for mlp_forward.1']
    #allocation6 [shape = 'u8[65536]{0}', space=vmem, size = 0x10000, scoped, tag = 'input window, operand 2, single buffered']
    %8 = vsyncpa [#allocation3], 0
    %9 = vsyncpa [#allocation5], 0
    // Predicated region
    $region2: #{mlp_forward.1} parent=1 // pred_check
      _
    $region3: #{mlp_forward.1} parent=1 // pred_check_branch
      %11 = sbr.rel (0) target = $region5
    $region4: #{mlp_forward.1} parent=1 // pred_region
      %s13 = ssub.s32 256, 256
      %14 = vsyncadd [#allocation3], %s13
      %s15 = sshll.u32 [#allocation2], 4
      %s16 = int_to_ptr.vmem [resolvable:$true] %s15
      %21 = dma.hbm_to_vmem [thread:$0]  %s0, 256, %s16, [#allocation3], 128, 128, 8
    $region5: #{mlp_forward.1} parent=1 // pred_fallthru
      _
    // Predicated region
    $region6: #{mlp_forward.1} parent=1 // pred_check
      _
    $region7: #{mlp_forward.1} parent=1 // pred_check_branch
      %23 = sbr.rel (0) target = $region9
    $region8: #{mlp_forward.1} parent=1 // pred_region
      %s25 = ssub.s32 1024, 1024
      %26 = vsyncadd [#allocation5], %s25
      %s27 = sshll.u32 [#allocation4], 4
      %s28 = int_to_ptr.vmem [resolvable:$true] %s27
      %33 = dma.hbm_to_vmem [thread:$0]  %s1, 1024, %s28, [#allocation5], 256, 256, 16
    $region9: #{mlp_forward.1} parent=1 // pred_fallthru
      _
    // Predicated region
    $region10: #{mlp_forward.1} parent=1 // pred_check
      _
    $region11: #{mlp_forward.1} parent=1 // pred_check_branch
      %35 = sbr.rel (0) target = $region13
    $region12: #{mlp_forward.1} parent=1 // pred_region
      %s37 = ssub.s32 2048, 2048
      %38 = vsyncadd [#allocation5], %s37
      %s39 = sshll.u32 [#allocation6], 4
      %s40 = int_to_ptr.vmem [resolvable:$true] %s39
      %45 = dma.hbm_to_vmem [thread:$0]  %s2, 2048, %s40, [#allocation5], 128, 128, 8
    $region13: #{mlp_forward.1} parent=1 // pred_fallthru
      _
    // Predicated region
    $region14: #{mlp_forward.1} parent=1 // pred_check
      _
    $region15: #{mlp_forward.1} parent=1 // pred_check_branch
      %47 = sbr.rel (0) target = $region17
    $region16: #{mlp_forward.1} parent=1 // pred_region
      %48 = dma.done [#allocation3], 256
    $region17: #{mlp_forward.1} parent=1 // pred_fallthru
      _
    // Predicated region
    $region18: #{mlp_forward.1} parent=1 // pred_check
      _
    $region19: #{mlp_forward.1} parent=1 // pred_check_branch
      %50 = sbr.rel (0) target = $region21
    $region20: #{mlp_forward.1} parent=1 // pred_region
      %51 = dma.done [#allocation5], 1024
    $region21: #{mlp_forward.1} parent=1 // pred_fallthru
      _
    // Predicated region
    $region22: #{mlp_forward.1} parent=1 // pred_check
      _
    $region23: #{mlp_forward.1} parent=1 // pred_check_branch
      %53 = sbr.rel (0) target = $region25
    $region24: #{mlp_forward.1} parent=1 // pred_region
      %54 = dma.done [#allocation5], 2048
    $region25: #{mlp_forward.1} parent=1 // pred_fallthru
      _
    %p55 = scmp.eq.s32.totalorder 0, 0
    // Predicated region
    $region26: #{mlp_forward.1} parent=1 // pred_check
      %p56 = pneg %p55
    $region27: #{mlp_forward.1} parent=1 // pred_check_branch
      %58 = sbr.rel (%p56) target = $region29
    $region28: #{mlp_forward.1} parent=1 // pred_region
      %59 = vst [vmem:[%s3] sm:$0xff] 0.0
      %60 = vst [vmem:[%s3 + $0x8] sm:$0xff] 0.0
    $region29: #{mlp_forward.1} parent=1 // pred_fallthru
      _
    %v61 = vld [vmem:[#allocation2] sm:$0xff]
    %v62 = vld [vmem:[#allocation2 + $0x8] sm:$0xff]
    %v63 = vld [vmem:[#allocation4] sm:$0xff]
    %v64 = vld [vmem:[#allocation4 + $0x8] sm:$0xff]
    %v65 = vld [vmem:[#allocation4 + $0x10] sm:$0xff]
    %v66 = vld [vmem:[#allocation4 + $0x18] sm:$0xff]
    %v67 = vld [vmem:[#allocation4 + $0x20] sm:$0xff]
    %v68 = vld [vmem:[#allocation4 + $0x28] sm:$0xff]
    %v69 = vld [vmem:[#allocation4 + $0x30] sm:$0xff]
    %v70 = vld [vmem:[#allocation4 + $0x38] sm:$0xff]
    %vm71 = vcmask 261120
    %v73 = vsel %vm71, %v61, 0
    %v76 = vsel %vm71, %v62, 0
    %78 = vmatprep.subr.mxu0 %v64
    %79 = vmatpush1.msra.mxu0 %v63
    %80 = vmatprep.subr.mxu0 %v66
    %81 = vmatpush1.msra.mxu0 %v65
    %82 = vmatprep.subr.mxu0 %v68
    %83 = vmatpush1.msra.mxu0 %v67
    %84 = vmatprep.subr.mxu0 %v70
    %85 = vmatpush1.msra.mxu0 %v69
    %86 = vmatprep.subr.mxu0 0.0
    %87 = vmatpush1.msra.mxu0 0.0
    %88 = vmatprep.subr.mxu0 0.0
    %89 = vmatpush1.msra.mxu0 0.0
    %90 = vmatprep.subr.mxu0 0.0
    %91 = vmatpush1.msra.mxu0 0.0
    %92 = vmatprep.subr.mxu0 0.0
    %93 = vmatpush1.msra.mxu0 0.0
    %94 = vmatprep.subr.mxu0 0.0
    %95 = vmatpush1.msra.mxu0 0.0
    %96 = vmatprep.subr.mxu0 0.0
    %97 = vmatpush1.msra.mxu0 0.0
    %98 = vmatprep.subr.mxu0 0.0
    %99 = vmatpush1.msra.mxu0 0.0
    %100 = vmatprep.subr.mxu0 0.0
    %101 = vmatpush1.msra.mxu0 0.0
    %102 = vmatprep.subr.mxu0 0.0
    %103 = vmatpush1.msra.mxu0 0.0
    %104 = vmatprep.subr.mxu0 0.0
    %105 = vmatpush1.msra.mxu0 0.0
    %106 = vmatprep.subr.mxu0 0.0
    %107 = vmatpush1.msra.mxu0 0.0
    %108 = vmatprep.subr.mxu0 0.0
    %109 = vmatpush1.msra.mxu0 0.0
    %110 = vmatprep.subr.mxu0 0.0
    %111 = vmatpush1.msra.mxu0 0.0
    %112 = vmatprep.subr.mxu0 0.0
    %113 = vmatpush1.msra.mxu0 0.0
    %114 = vmatprep.subr.mxu0 0.0
    %115 = vmatpush1.msra.mxu0 0.0
    %116 = vmatprep.subr.mxu0 0.0
    %117 = vmatpush1.msra.mxu0 0.0
    %118 = vmatprep.subr.mxu0 0.0
    %119 = vmatpush1.msra.mxu0 0.0
    %120 = vmatprep.subr.mxu0 0.0
    %121 = vmatpush1.msra.mxu0 0.0
    %122 = vmatprep.subr.mxu0 0.0
    %123 = vmatpush1.msra.mxu0 0.0
    %124 = vmatprep.subr.mxu0 0.0
    %125 = vmatpush1.msra.mxu0 0.0
    %126 = vmatprep.subr.mxu0 0.0
    %127 = vmatpush1.msra.mxu0 0.0
    %128 = vmatprep.subr.mxu0 0.0
    %129 = vmatpush1.msra.mxu0 0.0
    %130 = vmatprep.subr.mxu0 0.0
    %131 = vmatpush1.msra.mxu0 0.0
    %132 = vmatprep.subr.mxu0 0.0
    %133 = vmatpush1.msra.mxu0 0.0
    %134 = vmatprep.subr.mxu0 0.0
    %135 = vmatpush1.msra.mxu0 0.0
    %136 = vmatprep.subr.mxu0 0.0
    %137 = vmatpush1.msra.mxu0 0.0
    %138 = vmatprep.subr.mxu0 0.0
    %139 = vmatpush1.msra.mxu0 0.0
    %140 = vmatprep.subr.mxu0 0.0
    %141 = vmatpush1.msra.mxu0 0.0
    %142 = vmatprep.mubr.f32.mxu0 0.0
    %143 = vmatmul.mubr.f32.gmra.mrb[0].mxu0 %v73
    %v144 = vpop.f32.mrb[0].mxu0
    %v145 = vadd.f32 0.0, %v144
    %v146 = vpop.f32.mrb[0].mxu0
    %v147 = vadd.f32 0.0, %v146
    %148 = vmatprep.mubr.f32.mxu0 0.0
    %149 = vmatmul.mubr.f32.gmra.mrb[0].mxu0 %v76
    %v150 = vpop.f32.mrb[0].mxu0
    %v151 = vadd.f32 0.0, %v150
    %v152 = vpop.f32.mrb[0].mxu0
    %v153 = vadd.f32 0.0, %v152
    %154 = vdwg.mxu0
    %v155 = vxor.u32 %v145, 2147483648
    %v156 = vxor.u32 %v151, 2147483648
    %v157 = vmul.f32 %v155, 1.442695
    %v158 = vpow.pop %v157
    %v159 = vmul.f32 %v156, 1.442695
    %v160 = vpow.pop %v159
    %v161 = vadd.f32 %v158, 1.0
    %v162 = vadd.f32 %v160, 1.0
    %v163 = vrcp.pop %v161
    %v164 = vmul.f32 1.0, %v163
    %v165 = vrcp.pop %v162
    %v166 = vmul.f32 1.0, %v165
    %v167 = vmul.f32 %v145, %v164
    %v168 = vmul.f32 %v151, %v166
    %v169 = vmul.f32 %v167, %v147
    %v170 = vmul.f32 %v168, %v153
    %v171 = vld [vmem:[%s3] sm:$0xff]
    %v172 = vld [vmem:[%s3 + $0x8] sm:$0xff]
    %v173 = vld [vmem:[#allocation6] sm:$0xff]
    %v174 = vld [vmem:[#allocation6 + $0x8] sm:$0xff]
    %v175 = vld [vmem:[#allocation6 + $0x10] sm:$0xff]
    %v176 = vld [vmem:[#allocation6 + $0x18] sm:$0xff]
    %v177 = vld [vmem:[#allocation6 + $0x20] sm:$0xff]
    %v178 = vld [vmem:[#allocation6 + $0x28] sm:$0xff]
    %v179 = vld [vmem:[#allocation6 + $0x30] sm:$0xff]
    %v180 = vld [vmem:[#allocation6 + $0x38] sm:$0xff]
    %v181 = vld [vmem:[#allocation6 + $0x40] sm:$0xff]
    %v182 = vld [vmem:[#allocation6 + $0x48] sm:$0xff]
    %v183 = vld [vmem:[#allocation6 + $0x50] sm:$0xff]
    %v184 = vld [vmem:[#allocation6 + $0x58] sm:$0xff]
    %v185 = vld [vmem:[#allocation6 + $0x60] sm:$0xff]
    %v186 = vld [vmem:[#allocation6 + $0x68] sm:$0xff]
    %v187 = vld [vmem:[#allocation6 + $0x70] sm:$0xff]
    %v188 = vld [vmem:[#allocation6 + $0x78] sm:$0xff]
    %189 = vmatprep.subr.mxu0 0.0
    %190 = vmatpush1.msra.mxu0 %v173
    %191 = vmatprep.subr.mxu0 0.0
    %192 = vmatpush1.msra.mxu0 %v174
    %193 = vmatprep.subr.mxu0 0.0
    %194 = vmatpush1.msra.mxu0 %v175
    %195 = vmatprep.subr.mxu0 0.0
    %196 = vmatpush1.msra.mxu0 %v176
    %197 = vmatprep.subr.mxu0 0.0
    %198 = vmatpush1.msra.mxu0 %v177
    %199 = vmatprep.subr.mxu0 0.0
    %200 = vmatpush1.msra.mxu0 %v178
    %201 = vmatprep.subr.mxu0 0.0
    %202 = vmatpush1.msra.mxu0 %v179
    %203 = vmatprep.subr.mxu0 0.0
    %204 = vmatpush1.msra.mxu0 %v180
    %205 = vmatprep.subr.mxu0 0.0
    %206 = vmatpush1.msra.mxu0 %v181
    %207 = vmatprep.subr.mxu0 0.0
    %208 = vmatpush1.msra.mxu0 %v182
    %209 = vmatprep.subr.mxu0 0.0
    %210 = vmatpush1.msra.mxu0 %v183
    %211 = vmatprep.subr.mxu0 0.0
    %212 = vmatpush1.msra.mxu0 %v184
    %213 = vmatprep.subr.mxu0 0.0
    %214 = vmatpush1.msra.mxu0 %v185
    %215 = vmatprep.subr.mxu0 0.0
    %216 = vmatpush1.msra.mxu0 %v186
    %217 = vmatprep.subr.mxu0 0.0
    %218 = vmatpush1.msra.mxu0 %v187
    %219 = vmatprep.subr.mxu0 0.0
    %220 = vmatpush1.msra.mxu0 %v188
    %221 = vmatprep.subr.mxu0 0.0
    %222 = vmatpush1.msra.mxu0 0.0
    %223 = vmatprep.subr.mxu0 0.0
    %224 = vmatpush1.msra.mxu0 0.0
    %225 = vmatprep.subr.mxu0 0.0
    %226 = vmatpush1.msra.mxu0 0.0
    %227 = vmatprep.subr.mxu0 0.0
    %228 = vmatpush1.msra.mxu0 0.0
    %229 = vmatprep.subr.mxu0 0.0
    %230 = vmatpush1.msra.mxu0 0.0
    %231 = vmatprep.subr.mxu0 0.0
    %232 = vmatpush1.msra.mxu0 0.0
    %233 = vmatprep.subr.mxu0 0.0
    %234 = vmatpush1.msra.mxu0 0.0
    %235 = vmatprep.subr.mxu0 0.0
    %236 = vmatpush1.msra.mxu0 0.0
    %237 = vmatprep.subr.mxu0 0.0
    %238 = vmatpush1.msra.mxu0 0.0
    %239 = vmatprep.subr.mxu0 0.0
    %240 = vmatpush1.msra.mxu0 0.0
    %241 = vmatprep.subr.mxu0 0.0
    %242 = vmatpush1.msra.mxu0 0.0
    %243 = vmatprep.subr.mxu0 0.0
    %244 = vmatpush1.msra.mxu0 0.0
    %245 = vmatprep.subr.mxu0 0.0
    %246 = vmatpush1.msra.mxu0 0.0
    %247 = vmatprep.subr.mxu0 0.0
    %248 = vmatpush1.msra.mxu0 0.0
    %249 = vmatprep.subr.mxu0 0.0
    %250 = vmatpush1.msra.mxu0 0.0
    %251 = vmatprep.subr.mxu0 0.0
    %252 = vmatpush1.msra.mxu0 0.0
    %253 = vmatprep.mubr.f32.mxu0 0.0
    %254 = vmatmul.mubr.f32.gmra.mrb[0].mxu0 %v169
    %v255 = vpop.f32.mrb[0].mxu0
    %v256 = vadd.f32 0.0, %v255
    %v257 = vpop.f32.mrb[0].mxu0
    %258 = vmatprep.mubr.f32.mxu0 0.0
    %259 = vmatmul.mubr.f32.gmra.mrb[0].mxu0 %v170
    %v260 = vpop.f32.mrb[0].mxu0
    %v261 = vadd.f32 0.0, %v260
    %v262 = vpop.f32.mrb[0].mxu0
    %263 = vdwg.mxu0
    %v264 = vadd.f32 %v171, %v256
    %v265 = vadd.f32 %v172, %v261
    %266 = vst [vmem:[%s3] sm:$0xff] %v264
    %267 = vst [vmem:[%s3 + $0x8] sm:$0xff] %v265
    // Predicated region
    $region30: #{mlp_forward.1} parent=1 // pred_check
      _
    $region31: #{mlp_forward.1} parent=1 // pred_check_branch
      %269 = sbr.rel (0) target = $region33
    $region32: #{mlp_forward.1} parent=1 // pred_region
      _
    $region33: #{mlp_forward.1} parent=1 // pred_fallthru
      _
    // Predicated region
    $region34: #{mlp_forward.1} parent=1 // pred_check
      _
    $region35: #{mlp_forward.1} parent=1 // pred_check_branch
      %271 = sbr.rel (0) target = $region37
    $region36: #{mlp_forward.1} parent=1 // pred_region
      _
    $region37: #{mlp_forward.1} parent=1 // pred_fallthru
      _
    %272 = vsyncpa [#allocation3], 1
    %273 = vsyncpa [#allocation5], 1

</llo_original>
